<compile_context>
chip_gen: v7x
topology: tpu7x:2x2x1
jax: 0.10.0
libtpu: 0.0.40
codegen_flags: <defaults>
</compile_context>

<pallas_src>
import functools
import math

import jax
import jax.numpy as jnp
from jax.experimental import pallas as pl
from jax.experimental.pallas import tpu as pltpu


def _round_up(x, m):
    return ((x + m - 1) // m) * m


def _fold_factor(d):
    """How many rows to fold into the lane axis so the minor dim is 128-aligned."""
    if d % 128 == 0:
        return 1
    f = 128 // math.gcd(d, 128)           # lcm(d, 128) // d
    if f * d > 4096:
        # TODO(synk): lane-sparse fallback for D that does not fold cheaply into 128.
        return 1
    return f


def _per_buffer_budget_bytes():
    """Per-input-buffer VMEM budget, generation aware (Pallas double-buffers it)."""
    try:
        vmem = pltpu.get_tpu_info().vmem_capacity_bytes
    except Exception:
        return 4 * 1024 * 1024             # safe everywhere under default scoped VMEM
    if vmem >= 96 * 1024 * 1024:            # v5e / v6e: 128 MiB physical
        return 10 * 1024 * 1024
    if vmem >= 48 * 1024 * 1024:            # v7x: 64 MiB physical / 32 MiB scoped
        return 8 * 1024 * 1024
    return 4 * 1024 * 1024


def _pick_tile_rows(n_rows, lane_w, itemsize):
    row_bytes = _round_up(lane_w, 128) * itemsize
    rows = (_per_buffer_budget_bytes() // row_bytes) // 8 * 8
    rows = max(8, rows)
    return min(rows, max(8, _round_up(n_rows, 8)))


def _pad2_bytes(shape, itemsize):
    r = shape[-2] if len(shape) >= 2 else 1
    c = shape[-1]
    return _round_up(max(int(r), 1), 8) * _round_up(max(int(c), 1), 128) * itemsize


def _make_kernel(num_linears, n_rows, tile_rows, lane_w, fold, d):
    """Kernel closed over static (num_linears, row count, tile rows, lane width, fold, D)."""
    needs_mask = (n_rows % tile_rows) != 0

    def kernel(*refs):
        # refs = (emb, W1, b1, ..., Wk, bk, pred_out, agg_out, max_acc, min_acc)
        emb_ref = refs[0]
        wb_refs = refs[1:1 + 2 * num_linears]
        pred_ref, agg_ref = refs[1 + 2 * num_linears: 3 + 2 * num_linears]
        max_acc, min_acc = refs[3 + 2 * num_linears:]

        i = pl.program_id(0)
        last = pl.num_programs(0) - 1

        # --- init running accumulators on the first tile ---------------------
        @pl.when(i == 0)
        def _init():
            max_acc[...] = jnp.full_like(max_acc, -jnp.inf)
            min_acc[...] = jnp.full_like(min_acc, jnp.inf)

        # --- per-tile streamed reduction (VPU lockstep across 8-row groups) --
        def _update(max_src, min_src):
            g = tile_rows // 8
            if g > 1:
                tmax = jnp.max(max_src.reshape(g, 8, lane_w), axis=0)
                tmin = jnp.min(min_src.reshape(g, 8, lane_w), axis=0)
            else:
                tmax, tmin = max_src, min_src
            max_acc[...] = jnp.maximum(max_acc[...], tmax)
            min_acc[...] = jnp.minimum(min_acc[...], tmin)

        if needs_mask:
            # Steady-state tiles: no masking work at all.
            @pl.when(i < last)
            def _steady():
                t = emb_ref[...]
                _update(t, t)

            # Only the final (partial) tile pays for iota + compare + where.
            @pl.when(i == last)
            def _tail():
                t = emb_ref[...]
                row = (jax.lax.broadcasted_iota(jnp.int32, t.shape, 0)
                       + i * tile_rows)
                valid = row < n_rows
                _update(jnp.where(valid, t, -jnp.inf),
                        jnp.where(valid, t, jnp.inf))
        else:
            t = emb_ref[...]
            _update(t, t)

        # --- finalize: combine fold groups + sublanes, tiny MLP + sigmoid ----
        @pl.when(i == last)
        def _finalize():
            mx = max_acc[...]
            mn = min_acc[...]
            if fold > 1:
                # Combine the `fold` lane groups (static lane slices, one-off).
                mxf, mnf = mx[:, 0:d], mn[:, 0:d]
                for j in range(1, fold):
                    mxf = jnp.maximum(mxf, mx[:, j * d:(j + 1) * d])
                    mnf = jnp.minimum(mnf, mn[:, j * d:(j + 1) * d])
            else:
                mxf, mnf = mx, mn
            agg = (jnp.max(mxf, axis=0, keepdims=True)
                   - jnp.min(mnf, axis=0, keepdims=True)).astype(jnp.float32)
            agg_ref[...] = agg

            x = agg
            for li in range(num_linears):
                w = wb_refs[2 * li][...]                      # (in, out)
                b = wb_refs[2 * li + 1][...]                  # (1, out)
                x = jnp.dot(x, w, preferred_element_type=jnp.float32) + b
                if li != num_linears - 1:
                    x = jnp.maximum(x, 0.0)
            pred_ref[...] = 1.0 / (1.0 + jnp.exp(-x))

    return kernel


@functools.partial(jax.jit, static_argnames=("layers", "tile_rows"))
def maxmin_aggregator_fwd(embeddings, params, layers, tile_rows=None):
    """embeddings: (N, dim_vertex); params: flat tuple (W1, b1, W2, b2, ...) with
    weights stored (in, out).  tile_rows (optional) is in *folded*-row units."""
    n, d = embeddings.shape
    num_linears = len(layers) - 1
    assert layers[0] == d
    dtype = embeddings.dtype
    itemsize = jnp.dtype(dtype).itemsize

    # --- lane-dense fold: (N, D) -> (N/f, f*D), minor dim a multiple of 128 ----
    fold = _fold_factor(d)
    x = embeddings
    if fold > 1:
        n_pad = _round_up(n, fold)
        if n_pad != n:
            # Edge padding replicates valid rows -> max/min unaffected, no mask needed.
            # TODO(synk): this copies the array once; split off the ragged tail
            # instead if huge ragged N shows up in production.
            x = jnp.pad(x, ((0, n_pad - n), (0, 0)), mode="edge")
        x = x.reshape(n_pad // fold, fold * d)
    n2, lane_w = x.shape
    if n2 < 8:                                   # sublane-align tiny inputs
        x = jnp.pad(x, ((0, 8 - n2), (0, 0)), mode="edge")
        n2 = 8
    # All n2 rows of x now hold valid data (any padding is edge-replicated).

    # --- tile pick & grid -------------------------------------------------------
    if tile_rows is None:
        tn = _pick_tile_rows(n2, lane_w, itemsize)
    else:
        tn = min(max(8, (tile_rows // 8) * 8), max(8, _round_up(n2, 8)))
    grid = (pl.cdiv(n2, tn),)

    kernel = _make_kernel(num_linears, n2, tn, lane_w, fold, d)

    in_arrays = (x,) + tuple(params)
    in_specs = [pl.BlockSpec((tn, lane_w), lambda i: (i, 0))]   # streamed over rows
    for a in params:                                            # resident weights
        in_specs.append(pl.BlockSpec(a.shape, lambda i: (0, 0)))

    out_shape = (
        jax.ShapeDtypeStruct((1, layers[-1]), jnp.float32),     # pred
        jax.ShapeDtypeStruct((1, d), jnp.float32),              # aggregated embedding
    )
    # TODO(synk): pred/agg lane widths are sub-128 -> masked stores; irrelevant
    # here (written once per call) but pad/batch along lanes if they become hot.
    out_specs = (
        pl.BlockSpec((1, layers[-1]), lambda i: (0, 0)),
        pl.BlockSpec((1, d), lambda i: (0, 0)),
    )

    # --- VMEM footprint -> explicit limit (tiles + weights are double-buffered) --
    tile_bytes = _pad2_bytes((tn, lane_w), itemsize)
    wb_bytes = sum(_pad2_bytes(p.shape, jnp.dtype(p.dtype).itemsize) for p in params)
    scratch_bytes = 2 * _pad2_bytes((8, lane_w), itemsize)
    out_bytes = _pad2_bytes((1, layers[-1]), 4) + _pad2_bytes((1, d), 4)
    footprint = 2 * tile_bytes + 2 * wb_bytes + scratch_bytes + 2 * out_bytes
    vmem_limit = max(int(footprint) + 4 * 1024 * 1024, 32 * 1024 * 1024)

    pred, agg = pl.pallas_call(
        kernel,
        grid_spec=pltpu.PrefetchScalarGridSpec(
            num_scalar_prefetch=0,
            grid=grid,
            in_specs=in_specs,
            out_specs=out_specs,
            scratch_shapes=[pltpu.VMEM((8, lane_w), dtype),   # running max
                            pltpu.VMEM((8, lane_w), dtype)],  # running min
        ),
        out_shape=out_shape,
        compiler_params=pltpu.CompilerParams(
            dimension_semantics=("arbitrary",),               # N is a reduction axis
            vmem_limit_bytes=vmem_limit),
    )(*in_arrays)

    # Squeeze to match PyTorch 1-D outputs.
    return pred[0], agg[0]


def init_params(key, layers):
    """Deterministic PyTorch-Linear-like init; weights stored (in, out)."""
    params = []
    for i in range(len(layers) - 1):
        fan_in, fan_out = layers[i], layers[i + 1]
        key, kw, kb = jax.random.split(key, 3)
        bound = 1.0 / jnp.sqrt(fan_in)
        w = jax.random.uniform(kw, (fan_in, fan_out), jnp.float32, -bound, bound)
        b = jax.random.uniform(kb, (1, fan_out), jnp.float32, -bound, bound)
        params += [w, b]
    return tuple(params)


def reference_fwd(embeddings, params, layers):
    agg = jnp.max(embeddings, axis=0) - jnp.min(embeddings, axis=0)
    x = agg[None, :]
    num_linears = len(layers) - 1
    for i in range(num_linears):
        x = x @ params[2 * i] + params[2 * i + 1]
        if i != num_linears - 1:
            x = jnp.maximum(x, 0.0)
    return jax.nn.sigmoid(x)[0], agg


if __name__ == "__main__":
    key = jax.random.PRNGKey(0)
    k_emb, k_par, k_emb2, k_emb3 = jax.random.split(key, 4)

    layers = (32, 64, 8)
    params = init_params(k_par, layers)

    # Case 1: tiny graph (N=8, D=32) -> folds to (2,128), edge-padded to (8,128),
    # single grid step, no masking.
    emb_small = jax.random.normal(k_emb, (8, layers[0]), jnp.float32)
    pred, agg = maxmin_aggregator_fwd(emb_small, params, layers)
    jax.block_until_ready((pred, agg))
    pred_r, agg_r = reference_fwd(emb_small, params, layers)
    assert pred.shape == (layers[-1],) and agg.shape == (layers[0],)
    assert jnp.allclose(pred, pred_r, atol=1e-5, rtol=1e-5)
    assert jnp.allclose(agg, agg_r, atol=1e-5, rtol=1e-5)

    # Case 2: ragged N with an explicit small tile: N=50 -> edge-pad to 52 ->
    # fold to (13,128); TN=8 -> 2 grid steps (unmasked steady step + masked tail).
    emb_mid = jax.random.normal(k_emb2, (50, layers[0]), jnp.float32)
    pred2, agg2 = maxmin_aggregator_fwd(emb_mid, params, layers, tile_rows=8)
    jax.block_until_ready((pred2, agg2))
    pred2_r, agg2_r = reference_fwd(emb_mid, params, layers)
    assert jnp.allclose(pred2, pred2_r, atol=1e-5, rtol=1e-5)
    assert jnp.allclose(agg2, agg2_r, atol=1e-5, rtol=1e-5)

    # Case 3: default auto tile pick: N=1000 -> fold to (250,128), single
    # lane-dense tile with masked tail rows inside the tile.
    emb_big = jax.random.normal(k_emb3, (1000, layers[0]), jnp.float32)
    pred3, agg3 = maxmin_aggregator_fwd(emb_big, params, layers)
    jax.block_until_ready((pred3, agg3))
    pred3_r, agg3_r = reference_fwd(emb_big, params, layers)
    assert jnp.allclose(pred3, pred3_r, atol=1e-5, rtol=1e-5)
    assert jnp.allclose(agg3, agg3_r, atol=1e-5, rtol=1e-5)

    print("KERNEL_OK")
</pallas_src>

<mosaic_0001>
module attributes {stable_mosaic.version = 11 : i64} {
  func.func @kernel(%arg0: i32, %arg1: memref<8x128xf32, #tpu.memory_space<vmem>>, %arg2: memref<32x64xf32, #tpu.memory_space<vmem>>, %arg3: memref<1x64xf32, #tpu.memory_space<vmem>>, %arg4: memref<64x8xf32, #tpu.memory_space<vmem>>, %arg5: memref<1x8xf32, #tpu.memory_space<vmem>>, %arg6: memref<1x8xf32, #tpu.memory_space<vmem>>, %arg7: memref<1x32xf32, #tpu.memory_space<vmem>>, %arg8: memref<8x128xf32, #tpu.memory_space<vmem>>, %arg9: memref<8x128xf32, #tpu.memory_space<vmem>>) attributes {dimension_semantics = [#tpu.dimension_semantics<arbitrary>], iteration_bounds = array<i64: 1>, scalar_prefetch = 0 : i64, scratch_operands = 2 : i64, tpu.core_type = #tpu.core_type<tc>, window_params = [{transform_indices = @transform_0, window_bounds = array<i64: 8, 128>}, {pipeline_mode = #tpu.pipeline_mode<synchronous>, transform_indices = @transform_1, window_bounds = array<i64: 32, 64>}, {pipeline_mode = #tpu.pipeline_mode<synchronous>, transform_indices = @transform_2, window_bounds = array<i64: 1, 64>}, {pipeline_mode = #tpu.pipeline_mode<synchronous>, transform_indices = @transform_3, window_bounds = array<i64: 64, 8>}, {pipeline_mode = #tpu.pipeline_mode<synchronous>, transform_indices = @transform_4, window_bounds = array<i64: 1, 8>}, {pipeline_mode = #tpu.pipeline_mode<synchronous>, transform_indices = @transform_5, window_bounds = array<i64: 1, 8>}, {pipeline_mode = #tpu.pipeline_mode<synchronous>, transform_indices = @transform_6, window_bounds = array<i64: 1, 32>}]} {
    %c0_i32 = arith.constant 0 : i32
    %0 = arith.cmpi eq, %arg0, %c0_i32 : i32
    %1 = arith.extui %0 : i1 to i32
    %c0_i32_0 = arith.constant 0 : i32
    %2 = arith.cmpi ne, %1, %c0_i32_0 : i32
    scf.if %2 {
      %cst = arith.constant 0xFF800000 : f32
      %13 = vector.broadcast %cst : f32 to vector<8x128xf32>
      %c0_12 = arith.constant 0 : index
      %c0_13 = arith.constant 0 : index
      %14 = vector.load %arg8[%c0_12, %c0_13] : memref<8x128xf32, #tpu.memory_space<vmem>>, vector<8x128xf32>
      tpu.vector_store %arg8[%c0_12, %c0_13], %13 {strides = array<i32>} : memref<8x128xf32, #tpu.memory_space<vmem>>, vector<8x128xf32>,
      %cst_14 = arith.constant 0x7F800000 : f32
      %15 = vector.broadcast %cst_14 : f32 to vector<8x128xf32>
      %c0_15 = arith.constant 0 : index
      %c0_16 = arith.constant 0 : index
      %16 = vector.load %arg9[%c0_15, %c0_16] : memref<8x128xf32, #tpu.memory_space<vmem>>, vector<8x128xf32>
      tpu.vector_store %arg9[%c0_15, %c0_16], %15 {strides = array<i32>} : memref<8x128xf32, #tpu.memory_space<vmem>>, vector<8x128xf32>,
    } else {
    }
    %c0 = arith.constant 0 : index
    %c0_1 = arith.constant 0 : index
    %3 = vector.load %arg1[%c0, %c0_1] : memref<8x128xf32, #tpu.memory_space<vmem>>, vector<8x128xf32>
    %c0_2 = arith.constant 0 : index
    %c0_3 = arith.constant 0 : index
    %4 = vector.load %arg8[%c0_2, %c0_3] : memref<8x128xf32, #tpu.memory_space<vmem>>, vector<8x128xf32>
    %5 = arith.maximumf %4, %3 : vector<8x128xf32>
    %c0_4 = arith.constant 0 : index
    %c0_5 = arith.constant 0 : index
    %6 = vector.load %arg8[%c0_4, %c0_5] : memref<8x128xf32, #tpu.memory_space<vmem>>, vector<8x128xf32>
    tpu.vector_store %arg8[%c0_4, %c0_5], %5 {strides = array<i32>} : memref<8x128xf32, #tpu.memory_space<vmem>>, vector<8x128xf32>,
    %c0_6 = arith.constant 0 : index
    %c0_7 = arith.constant 0 : index
    %7 = vector.load %arg9[%c0_6, %c0_7] : memref<8x128xf32, #tpu.memory_space<vmem>>, vector<8x128xf32>
    %8 = arith.minimumf %7, %3 : vector<8x128xf32>
    %c0_8 = arith.constant 0 : index
    %c0_9 = arith.constant 0 : index
    %9 = vector.load %arg9[%c0_8, %c0_9] : memref<8x128xf32, #tpu.memory_space<vmem>>, vector<8x128xf32>
    tpu.vector_store %arg9[%c0_8, %c0_9], %8 {strides = array<i32>} : memref<8x128xf32, #tpu.memory_space<vmem>>, vector<8x128xf32>,
    %c0_i32_10 = arith.constant 0 : i32
    %10 = arith.cmpi eq, %arg0, %c0_i32_10 : i32
    %11 = arith.extui %10 : i1 to i32
    %c0_i32_11 = arith.constant 0 : i32
    %12 = arith.cmpi ne, %11, %c0_i32_11 : i32
    scf.if %12 {
      %c0_12 = arith.constant 0 : index
      %c0_13 = arith.constant 0 : index
      %13 = vector.load %arg8[%c0_12, %c0_13] : memref<8x128xf32, #tpu.memory_space<vmem>>, vector<8x128xf32>
      %c0_14 = arith.constant 0 : index
      %c0_15 = arith.constant 0 : index
      %14 = vector.load %arg9[%c0_14, %c0_15] : memref<8x128xf32, #tpu.memory_space<vmem>>, vector<8x128xf32>
      %15 = vector.extract_strided_slice %13 {offsets = [0, 0], sizes = [8, 32], strides = [1, 1]} : vector<8x128xf32> to vector<8x32xf32>
      %16 = vector.extract_strided_slice %14 {offsets = [0, 0], sizes = [8, 32], strides = [1, 1]} : vector<8x128xf32> to vector<8x32xf32>
      %17 = vector.extract_strided_slice %13 {offsets = [0, 32], sizes = [8, 32], strides = [1, 1]} : vector<8x128xf32> to vector<8x32xf32>
      %18 = arith.maximumf %15, %17 : vector<8x32xf32>
      %19 = vector.extract_strided_slice %14 {offsets = [0, 32], sizes = [8, 32], strides = [1, 1]} : vector<8x128xf32> to vector<8x32xf32>
      %20 = arith.minimumf %16, %19 : vector<8x32xf32>
      %21 = vector.extract_strided_slice %13 {offsets = [0, 64], sizes = [8, 32], strides = [1, 1]} : vector<8x128xf32> to vector<8x32xf32>
      %22 = arith.maximumf %18, %21 : vector<8x32xf32>
      %23 = vector.extract_strided_slice %14 {offsets = [0, 64], sizes = [8, 32], strides = [1, 1]} : vector<8x128xf32> to vector<8x32xf32>
      %24 = arith.minimumf %20, %23 : vector<8x32xf32>
      %25 = vector.extract_strided_slice %13 {offsets = [0, 96], sizes = [8, 32], strides = [1, 1]} : vector<8x128xf32> to vector<8x32xf32>
      %26 = arith.maximumf %22, %25 : vector<8x32xf32>
      %27 = vector.extract_strided_slice %14 {offsets = [0, 96], sizes = [8, 32], strides = [1, 1]} : vector<8x128xf32> to vector<8x32xf32>
      %28 = arith.minimumf %24, %27 : vector<8x32xf32>
      %cst = arith.constant dense<0xFF800000> : vector<32xf32>
      %29 = vector.multi_reduction <maximumf>, %26, %cst [0] : vector<8x32xf32> to vector<32xf32>
      %30 = vector.shape_cast %29 : vector<32xf32> to vector<1x32xf32>
      %cst_16 = arith.constant dense<0x7F800000> : vector<32xf32>
      %31 = vector.multi_reduction <minimumf>, %28, %cst_16 [0] : vector<8x32xf32> to vector<32xf32>
      %32 = vector.shape_cast %31 : vector<32xf32> to vector<1x32xf32>
      %33 = arith.subf %30, %32 : vector<1x32xf32>
      %c0_17 = arith.constant 0 : index
      %c0_18 = arith.constant 0 : index
      %34 = vector.load %arg7[%c0_17, %c0_18] : memref<1x32xf32, #tpu.memory_space<vmem>>, vector<1x32xf32>
      tpu.vector_store %arg7[%c0_17, %c0_18], %33 {strides = array<i32>} : memref<1x32xf32, #tpu.memory_space<vmem>>, vector<1x32xf32>,
      %c0_19 = arith.constant 0 : index
      %c0_20 = arith.constant 0 : index
      %35 = vector.load %arg2[%c0_19, %c0_20] : memref<32x64xf32, #tpu.memory_space<vmem>>, vector<32x64xf32>
      %c0_21 = arith.constant 0 : index
      %c0_22 = arith.constant 0 : index
      %36 = vector.load %arg3[%c0_21, %c0_22] : memref<1x64xf32, #tpu.memory_space<vmem>>, vector<1x64xf32>
      %cst_23 = arith.constant dense<0.000000e+00> : vector<1x64xf32>
      %37 = tpu.matmul %33, %35, %cst_23 {dimension_numbers = #tpu.dot_dimension_numbers<[1], [0], [0], [1], [0, 0, 1, 1], [], []>} : vector<1x32xf32>, vector<32x64xf32>, vector<1x64xf32> -> vector<1x64xf32>
      %38 = arith.addf %37, %36 : vector<1x64xf32>
      %cst_24 = arith.constant 0.000000e+00 : f32
      %39 = vector.broadcast %cst_24 : f32 to vector<1x64xf32>
      %40 = arith.maximumf %38, %39 : vector<1x64xf32>
      %c0_25 = arith.constant 0 : index
      %c0_26 = arith.constant 0 : index
      %41 = vector.load %arg4[%c0_25, %c0_26] : memref<64x8xf32, #tpu.memory_space<vmem>>, vector<64x8xf32>
      %c0_27 = arith.constant 0 : index
      %c0_28 = arith.constant 0 : index
      %42 = vector.load %arg5[%c0_27, %c0_28] : memref<1x8xf32, #tpu.memory_space<vmem>>, vector<1x8xf32>
      %cst_29 = arith.constant dense<0.000000e+00> : vector<1x8xf32>
      %43 = tpu.matmul %40, %41, %cst_29 {dimension_numbers = #tpu.dot_dimension_numbers<[1], [0], [0], [1], [0, 0, 1, 1], [], []>} : vector<1x64xf32>, vector<64x8xf32>, vector<1x8xf32> -> vector<1x8xf32>
      %44 = arith.addf %43, %42 : vector<1x8xf32>
      %cst_30 = arith.constant 0.000000e+00 : f32
      %45 = vector.broadcast %cst_30 : f32 to vector<1x8xf32>
      %46 = arith.subf %45, %44 : vector<1x8xf32>
      %47 = math.exp %46 : vector<1x8xf32>
      %cst_31 = arith.constant 1.000000e+00 : f32
      %48 = vector.broadcast %cst_31 : f32 to vector<1x8xf32>
      %49 = arith.addf %48, %47 : vector<1x8xf32>
      %cst_32 = arith.constant 1.000000e+00 : f32
      %50 = vector.broadcast %cst_32 : f32 to vector<1x8xf32>
      %51 = arith.divf %50, %49 : vector<1x8xf32>
      %c0_33 = arith.constant 0 : index
      %c0_34 = arith.constant 0 : index
      %52 = vector.load %arg6[%c0_33, %c0_34] : memref<1x8xf32, #tpu.memory_space<vmem>>, vector<1x8xf32>
      tpu.vector_store %arg6[%c0_33, %c0_34], %51 {strides = array<i32>} : memref<1x8xf32, #tpu.memory_space<vmem>>, vector<1x8xf32>,
    } else {
    }
    return
  }
  func.func @transform_0(%arg0: i32) -> (i32, i32) {
    %c0_i32 = arith.constant 0 : i32
    %c0_i32_0 = arith.constant 0 : i32
    return %arg0, %c0_i32 : i32, i32
  }
  func.func @transform_1(%arg0: i32) -> (i32, i32) {
    %c0_i32 = arith.constant 0 : i32
    %c0_i32_0 = arith.constant 0 : i32
    %c0_i32_1 = arith.constant 0 : i32
    return %c0_i32, %c0_i32_0 : i32, i32
  }
  func.func @transform_2(%arg0: i32) -> (i32, i32) {
    %c0_i32 = arith.constant 0 : i32
    %c0_i32_0 = arith.constant 0 : i32
    %c0_i32_1 = arith.constant 0 : i32
    return %c0_i32, %c0_i32_0 : i32, i32
  }
  func.func @transform_3(%arg0: i32) -> (i32, i32) {
    %c0_i32 = arith.constant 0 : i32
    %c0_i32_0 = arith.constant 0 : i32
    %c0_i32_1 = arith.constant 0 : i32
    return %c0_i32, %c0_i32_0 : i32, i32
  }
  func.func @transform_4(%arg0: i32) -> (i32, i32) {
    %c0_i32 = arith.constant 0 : i32
    %c0_i32_0 = arith.constant 0 : i32
    %c0_i32_1 = arith.constant 0 : i32
    return %c0_i32, %c0_i32_0 : i32, i32
  }
  func.func @transform_5(%arg0: i32) -> (i32, i32) {
    %c0_i32 = arith.constant 0 : i32
    %c0_i32_0 = arith.constant 0 : i32
    %c0_i32_1 = arith.constant 0 : i32
    return %c0_i32, %c0_i32_0 : i32, i32
  }
  func.func @transform_6(%arg0: i32) -> (i32, i32) {
    %c0_i32 = arith.constant 0 : i32
    %c0_i32_0 = arith.constant 0 : i32
    %c0_i32_1 = arith.constant 0 : i32
    return %c0_i32, %c0_i32_0 : i32, i32
  }
}

</mosaic_0001>

<llo_original>
// kernel: maxmin_aggregator_fwd.1
$region0: #{maxmin_aggregator_fwd.1}
  #allocation0 [shape = 'u32[]', space=smem, size = 0x4, offset = 0x4, fixed_abs, tag = 'smem constant byte address 0x4 - core index']
  #allocation1 [shape = 'u32[144,128]{1,0:T(1,128)}', space=vmem, size = 0x12000, scoped, tag = 'internal scratch']
  #allocation2 [shape = 'f32[8,128]{1,0:T(8,128)}', space=vmem, size = 0x1000, scoped, tag = 'scratch operand']
  #allocation3 [shape = 'f32[8,128]{1,0:T(8,128)}', space=vmem, size = 0x1000, scoped, tag = 'scratch operand']
  %s0 = inlined_call_operand.vmem [shape: f32[8,128], index: 0, kind: input, shape index: {}]
  %s1 = inlined_call_operand.vmem [shape: f32[32,64], index: 1, kind: input, shape index: {}]
  %s2 = inlined_call_operand.vmem [shape: f32[1,64], index: 2, kind: input, shape index: {}]
  %s3 = inlined_call_operand.vmem [shape: f32[64,8], index: 3, kind: input, shape index: {}]
  %s4 = inlined_call_operand.vmem [shape: f32[1,8], index: 4, kind: input, shape index: {}]
  %s5 = inlined_call_operand.hbm [shape: f32[1,8], index: 5, kind: output, shape index: {0}]
  %s6 = inlined_call_operand.hbm [shape: f32[1,32], index: 6, kind: output, shape index: {1}]
  %7 = xla_tuple %s5, %s6
  %s8 = sld [smem:[#allocation0]]
  $region46: #{maxmin_aggregator_fwd.1} parent=0
    _
  %s10 = ssub.s32 1, %s8
  %s11 = scalar_select 0, %s10, %s8
  $region1: #{maxmin_aggregator_fwd.1} parent=0
    #allocation4 [shape = 'u8[512]{0}', space=vmem, size = 0x400, scoped, tag = 'output window, operand 0, single buffered']
    #allocation5 [shape = 's32[1]{0}', space=sflag, size = 0x4, scoped, tag = 'scoped memory for maxmin_aggregator_fwd.1']
    #allocation6 [shape = 'u8[512]{0}', space=vmem, size = 0x400, scoped, tag = 'output window, operand 1, single buffered']
    #allocation7 [shape = 's32[1]{0}', space=sflag, size = 0x4, scoped, tag = 'scoped memory for maxmin_aggregator_fwd.1']
    %12 = vsyncpa [#allocation5], 0
    %13 = vsyncpa [#allocation7], 0
    // Predicated region
    $region2: #{maxmin_aggregator_fwd.1} parent=1 // pred_check
      _
    $region3: #{maxmin_aggregator_fwd.1} parent=1 // pred_check_branch
      %15 = sbr.rel (0) target = $region5
    $region4: #{maxmin_aggregator_fwd.1} parent=1 // pred_region
      _
    $region5: #{maxmin_aggregator_fwd.1} parent=1 // pred_fallthru
      _
    // Predicated region
    $region6: #{maxmin_aggregator_fwd.1} parent=1 // pred_check
      _
    $region7: #{maxmin_aggregator_fwd.1} parent=1 // pred_check_branch
      %17 = sbr.rel (0) target = $region9
    $region8: #{maxmin_aggregator_fwd.1} parent=1 // pred_region
      _
    $region9: #{maxmin_aggregator_fwd.1} parent=1 // pred_fallthru
      _
    // Predicated region
    $region10: #{maxmin_aggregator_fwd.1} parent=1 // pred_check
      _
    $region11: #{maxmin_aggregator_fwd.1} parent=1 // pred_check_branch
      %19 = sbr.rel (0) target = $region13
    $region12: #{maxmin_aggregator_fwd.1} parent=1 // pred_region
      _
    $region13: #{maxmin_aggregator_fwd.1} parent=1 // pred_fallthru
      _
    // Predicated region
    $region14: #{maxmin_aggregator_fwd.1} parent=1 // pred_check
      _
    $region15: #{maxmin_aggregator_fwd.1} parent=1 // pred_check_branch
      %21 = sbr.rel (0) target = $region17
    $region16: #{maxmin_aggregator_fwd.1} parent=1 // pred_region
      _
    $region17: #{maxmin_aggregator_fwd.1} parent=1 // pred_fallthru
      _
    // Predicated region
    $region18: #{maxmin_aggregator_fwd.1} parent=1 // pred_check
      _
    $region19: #{maxmin_aggregator_fwd.1} parent=1 // pred_check_branch
      %23 = sbr.rel (0) target = $region21
    $region20: #{maxmin_aggregator_fwd.1} parent=1 // pred_region
      _
    $region21: #{maxmin_aggregator_fwd.1} parent=1 // pred_fallthru
      _
    %p24 = scmp.eq.s32.totalorder 0, 0
    // Predicated region
    $region22: #{maxmin_aggregator_fwd.1} parent=1 // pred_check
      %p25 = pneg %p24
    $region23: #{maxmin_aggregator_fwd.1} parent=1 // pred_check_branch
      %27 = sbr.rel (%p25) target = $region25
    $region24: #{maxmin_aggregator_fwd.1} parent=1 // pred_region
      %28 = vst [vmem:[#allocation2] sm:$0xff] -inf
      %29 = vst [vmem:[#allocation3] sm:$0xff] inf
    $region25: #{maxmin_aggregator_fwd.1} parent=1 // pred_fallthru
      _
    %v30 = vld [vmem:[%s0] sm:$0xff]
    %v31 = vld [vmem:[#allocation2] sm:$0xff]
    %v32 = vmax.f32 %v31, %v30
    %33 = vst [vmem:[#allocation2] sm:$0xff] %v32
    %v34 = vld [vmem:[#allocation3] sm:$0xff]
    %v35 = vmin.f32 %v34, %v30
    %36 = vst [vmem:[#allocation3] sm:$0xff] %v35
    // Predicated region
    $region26: #{maxmin_aggregator_fwd.1} parent=1 // pred_check
      %p37 = pneg %p24
    $region27: #{maxmin_aggregator_fwd.1} parent=1 // pred_check_branch
      %39 = sbr.rel (%p37) target = $region29
    $region28: #{maxmin_aggregator_fwd.1} parent=1 // pred_region
      %v40 = vld [vmem:[#allocation2] sm:$0xff]
      %v41 = vld [vmem:[#allocation3] sm:$0xff]
      %43 = vrot.lane.b32.xlu0 %v40, 96
      %v44 = vpop.permute.xlu0 %43
      %v46 = vmax.f32 %v40, %v44
      %48 = vrot.lane.b32.xlu0 %v41, 96
      %v49 = vpop.permute.xlu0 %48
      %v51 = vmin.f32 %v41, %v49
      %52 = vrot.lane.b32.xlu0 %v40, 64
      %v53 = vpop.permute.xlu0 %52
      %v55 = vmax.f32 %v46, %v53
      %56 = vrot.lane.b32.xlu0 %v41, 64
      %v57 = vpop.permute.xlu0 %56
      %v59 = vmin.f32 %v51, %v57
      %60 = vrot.lane.b32.xlu0 %v40, 32
      %v61 = vpop.permute.xlu0 %60
      %v63 = vmax.f32 %v55, %v61
      %64 = vrot.lane.b32.xlu0 %v41, 32
      %v65 = vpop.permute.xlu0 %64
      %v67 = vmin.f32 %v59, %v65
      %vm68 = vcmask 261120
      %v69 = vsel %vm68, %v63, -inf
      %v70 = vrot.slane %v69, 4
      %v71 = vmax.f32 %v69, %v70
      %v72 = vrot.slane %v71, 2
      %v73 = vmax.f32 %v71, %v72
      %v74 = vrot.slane %v73, 1
      %v75 = vmax.f32 %v73, %v74
      %v76 = vsel %vm68, %v67, inf
      %v77 = vrot.slane %v76, 4
      %v78 = vmin.f32 %v76, %v77
      %v79 = vrot.slane %v78, 2
      %v80 = vmin.f32 %v78, %v79
      %v81 = vrot.slane %v80, 1
      %v82 = vmin.f32 %v80, %v81
      %v83 = vsub.f32 %v75, %v82
      %vm84 = vcmask 253952
      %85 = vst.msk [vmem:[#allocation6] sm:$0x1] %vm84, %v83
      %v86 = vld [vmem:[%s1] sm:$0xff]
      %v87 = vld [vmem:[%s1 + $0x8] sm:$0xff]
      %v88 = vld [vmem:[%s1 + $0x10] sm:$0xff]
      %v89 = vld [vmem:[%s1 + $0x18] sm:$0xff]
      %v90 = vld [vmem:[%s2] sm:$0x1]
      %v92 = vsel %vm68, %v83, 0
      %94 = vmatprep.subr.mxu0 0.0
      %95 = vmatpush1.msra.mxu0 %v86
      %96 = vmatprep.subr.mxu0 0.0
      %97 = vmatpush1.msra.mxu0 %v87
      %98 = vmatprep.subr.mxu0 0.0
      %99 = vmatpush1.msra.mxu0 %v88
      %100 = vmatprep.subr.mxu0 0.0
      %101 = vmatpush1.msra.mxu0 %v89
      %102 = vmatprep.subr.mxu0 0.0
      %103 = vmatpush1.msra.mxu0 0.0
      %104 = vmatprep.subr.mxu0 0.0
      %105 = vmatpush1.msra.mxu0 0.0
      %106 = vmatprep.subr.mxu0 0.0
      %107 = vmatpush1.msra.mxu0 0.0
      %108 = vmatprep.subr.mxu0 0.0
      %109 = vmatpush1.msra.mxu0 0.0
      %110 = vmatprep.subr.mxu0 0.0
      %111 = vmatpush1.msra.mxu0 0.0
      %112 = vmatprep.subr.mxu0 0.0
      %113 = vmatpush1.msra.mxu0 0.0
      %114 = vmatprep.subr.mxu0 0.0
      %115 = vmatpush1.msra.mxu0 0.0
      %116 = vmatprep.subr.mxu0 0.0
      %117 = vmatpush1.msra.mxu0 0.0
      %118 = vmatprep.subr.mxu0 0.0
      %119 = vmatpush1.msra.mxu0 0.0
      %120 = vmatprep.subr.mxu0 0.0
      %121 = vmatpush1.msra.mxu0 0.0
      %122 = vmatprep.subr.mxu0 0.0
      %123 = vmatpush1.msra.mxu0 0.0
      %124 = vmatprep.subr.mxu0 0.0
      %125 = vmatpush1.msra.mxu0 0.0
      %126 = vmatprep.subr.mxu0 0.0
      %127 = vmatpush1.msra.mxu0 0.0
      %128 = vmatprep.subr.mxu0 0.0
      %129 = vmatpush1.msra.mxu0 0.0
      %130 = vmatprep.subr.mxu0 0.0
      %131 = vmatpush1.msra.mxu0 0.0
      %132 = vmatprep.subr.mxu0 0.0
      %133 = vmatpush1.msra.mxu0 0.0
      %134 = vmatprep.subr.mxu0 0.0
      %135 = vmatpush1.msra.mxu0 0.0
      %136 = vmatprep.subr.mxu0 0.0
      %137 = vmatpush1.msra.mxu0 0.0
      %138 = vmatprep.subr.mxu0 0.0
      %139 = vmatpush1.msra.mxu0 0.0
      %140 = vmatprep.subr.mxu0 0.0
      %141 = vmatpush1.msra.mxu0 0.0
      %142 = vmatprep.subr.mxu0 0.0
      %143 = vmatpush1.msra.mxu0 0.0
      %144 = vmatprep.subr.mxu0 0.0
      %145 = vmatpush1.msra.mxu0 0.0
      %146 = vmatprep.subr.mxu0 0.0
      %147 = vmatpush1.msra.mxu0 0.0
      %148 = vmatprep.subr.mxu0 0.0
      %149 = vmatpush1.msra.mxu0 0.0
      %150 = vmatprep.subr.mxu0 0.0
      %151 = vmatpush1.msra.mxu0 0.0
      %152 = vmatprep.subr.mxu0 0.0
      %153 = vmatpush1.msra.mxu0 0.0
      %154 = vmatprep.subr.mxu0 0.0
      %155 = vmatpush1.msra.mxu0 0.0
      %156 = vmatprep.subr.mxu0 0.0
      %157 = vmatpush1.msra.mxu0 0.0
      %158 = vmatprep.mubr.f32.mxu0 0.0
      %159 = vmatmul.mubr.f32.gmra.mrb[0].mxu0 %v92
      %v160 = vpop.f32.mrb[0].mxu0
      %v161 = vadd.f32 %v90, %v160
      %v162 = vpop.f32.mrb[0].mxu0
      %163 = vdwg.mxu0
      %v164 = vmax.f32 %v161, 0.0
      %v165 = vld [vmem:[%s3] sm:$0xff]
      %v166 = vld [vmem:[%s3 + $0x8] sm:$0xff]
      %v167 = vld [vmem:[%s3 + $0x10] sm:$0xff]
      %v168 = vld [vmem:[%s3 + $0x18] sm:$0xff]
      %v169 = vld [vmem:[%s3 + $0x20] sm:$0xff]
      %v170 = vld [vmem:[%s3 + $0x28] sm:$0xff]
      %v171 = vld [vmem:[%s3 + $0x30] sm:$0xff]
      %v172 = vld [vmem:[%s3 + $0x38] sm:$0xff]
      %v173 = vld [vmem:[%s4] sm:$0x1]
      %vm174 = vcmask 523264
      %v176 = vsel %vm174, %v164, 0
      %178 = vmatprep.subr.mxu0 0.0
      %179 = vmatpush1.msra.mxu0 %v165
      %180 = vmatprep.subr.mxu0 0.0
      %181 = vmatpush1.msra.mxu0 %v166
      %182 = vmatprep.subr.mxu0 0.0
      %183 = vmatpush1.msra.mxu0 %v167
      %184 = vmatprep.subr.mxu0 0.0
      %185 = vmatpush1.msra.mxu0 %v168
      %186 = vmatprep.subr.mxu0 0.0
      %187 = vmatpush1.msra.mxu0 %v169
      %188 = vmatprep.subr.mxu0 0.0
      %189 = vmatpush1.msra.mxu0 %v170
      %190 = vmatprep.subr.mxu0 0.0
      %191 = vmatpush1.msra.mxu0 %v171
      %192 = vmatprep.subr.mxu0 0.0
      %193 = vmatpush1.msra.mxu0 %v172
      %194 = vmatprep.subr.mxu0 0.0
      %195 = vmatpush1.msra.mxu0 0.0
      %196 = vmatprep.subr.mxu0 0.0
      %197 = vmatpush1.msra.mxu0 0.0
      %198 = vmatprep.subr.mxu0 0.0
      %199 = vmatpush1.msra.mxu0 0.0
      %200 = vmatprep.subr.mxu0 0.0
      %201 = vmatpush1.msra.mxu0 0.0
      %202 = vmatprep.subr.mxu0 0.0
      %203 = vmatpush1.msra.mxu0 0.0
      %204 = vmatprep.subr.mxu0 0.0
      %205 = vmatpush1.msra.mxu0 0.0
      %206 = vmatprep.subr.mxu0 0.0
      %207 = vmatpush1.msra.mxu0 0.0
      %208 = vmatprep.subr.mxu0 0.0
      %209 = vmatpush1.msra.mxu0 0.0
      %210 = vmatprep.subr.mxu0 0.0
      %211 = vmatpush1.msra.mxu0 0.0
      %212 = vmatprep.subr.mxu0 0.0
      %213 = vmatpush1.msra.mxu0 0.0
      %214 = vmatprep.subr.mxu0 0.0
      %215 = vmatpush1.msra.mxu0 0.0
      %216 = vmatprep.subr.mxu0 0.0
      %217 = vmatpush1.msra.mxu0 0.0
      %218 = vmatprep.subr.mxu0 0.0
      %219 = vmatpush1.msra.mxu0 0.0
      %220 = vmatprep.subr.mxu0 0.0
      %221 = vmatpush1.msra.mxu0 0.0
      %222 = vmatprep.subr.mxu0 0.0
      %223 = vmatpush1.msra.mxu0 0.0
      %224 = vmatprep.subr.mxu0 0.0
      %225 = vmatpush1.msra.mxu0 0.0
      %226 = vmatprep.subr.mxu0 0.0
      %227 = vmatpush1.msra.mxu0 0.0
      %228 = vmatprep.subr.mxu0 0.0
      %229 = vmatpush1.msra.mxu0 0.0
      %230 = vmatprep.subr.mxu0 0.0
      %231 = vmatpush1.msra.mxu0 0.0
      %232 = vmatprep.subr.mxu0 0.0
      %233 = vmatpush1.msra.mxu0 0.0
      %234 = vmatprep.subr.mxu0 0.0
      %235 = vmatpush1.msra.mxu0 0.0
      %236 = vmatprep.subr.mxu0 0.0
      %237 = vmatpush1.msra.mxu0 0.0
      %238 = vmatprep.subr.mxu0 0.0
      %239 = vmatpush1.msra.mxu0 0.0
      %240 = vmatprep.subr.mxu0 0.0
      %241 = vmatpush1.msra.mxu0 0.0
      %242 = vmatprep.mubr.f32.mxu0 0.0
      %243 = vmatmul.mubr.f32.gmra.mrb[0].mxu0 %v176
      %v244 = vpop.f32.mrb[0].mxu0
      %v245 = vadd.f32 %v173, %v244
      %v246 = vpop.f32.mrb[0].mxu0
      %247 = vdwg.mxu0
      %v248 = vsub.f32 0.0, %v245
      %v249 = vmul.f32 %v248, 1.442695
      %v250 = vpow.pop %v249
      %v251 = vadd.f32 %v250, 1.0
      %v252 = vrcp.pop %v251
      %v253 = vmul.f32 1.0, %v252
      %vm254 = vcmask 57344
      %255 = vst.msk [vmem:[#allocation4] sm:$0x1] %vm254, %v253
    $region29: #{maxmin_aggregator_fwd.1} parent=1 // pred_fallthru
      _
    // Predicated region
    $region30: #{maxmin_aggregator_fwd.1} parent=1 // pred_check
      _
    $region31: #{maxmin_aggregator_fwd.1} parent=1 // pred_check_branch
      %257 = sbr.rel (0) target = $region33
    $region32: #{maxmin_aggregator_fwd.1} parent=1 // pred_region
      %s259 = ssub.s32 16, 16
      %260 = vsyncadd [#allocation5], %s259
      %s262 = sshll.u32 [#allocation4], 4
      %s263 = int_to_ptr.vmem [resolvable:$true] %s262
      %265 = dma.vmem_to_hbm [thread:$0]  %s263, 16, %s5, [#allocation5]
    $region33: #{maxmin_aggregator_fwd.1} parent=1 // pred_fallthru
      _
    // Predicated region
    $region34: #{maxmin_aggregator_fwd.1} parent=1 // pred_check
      _
    $region35: #{maxmin_aggregator_fwd.1} parent=1 // pred_check_branch
      %267 = sbr.rel (0) target = $region37
    $region36: #{maxmin_aggregator_fwd.1} parent=1 // pred_region
      %s269 = ssub.s32 16, 16
      %270 = vsyncadd [#allocation7], %s269
      %s272 = sshll.u32 [#allocation6], 4
      %s273 = int_to_ptr.vmem [resolvable:$true] %s272
      %275 = dma.vmem_to_hbm [thread:$0]  %s273, 16, %s6, [#allocation7]
    $region37: #{maxmin_aggregator_fwd.1} parent=1 // pred_fallthru
      _
    // Predicated region
    $region38: #{maxmin_aggregator_fwd.1} parent=1 // pred_check
      _
    $region39: #{maxmin_aggregator_fwd.1} parent=1 // pred_check_branch
      %277 = sbr.rel (0) target = $region41
    $region40: #{maxmin_aggregator_fwd.1} parent=1 // pred_region
      %278 = dma.done [#allocation5], 16
    $region41: #{maxmin_aggregator_fwd.1} parent=1 // pred_fallthru
      _
    // Predicated region
    $region42: #{maxmin_aggregator_fwd.1} parent=1 // pred_check
      _
    $region43: #{maxmin_aggregator_fwd.1} parent=1 // pred_check_branch
      %280 = sbr.rel (0) target = $region45
    $region44: #{maxmin_aggregator_fwd.1} parent=1 // pred_region
      %281 = dma.done [#allocation7], 16
    $region45: #{maxmin_aggregator_fwd.1} parent=1 // pred_fallthru
      _
    %282 = vsyncpa [#allocation5], 1
    %283 = vsyncpa [#allocation7], 1

</llo_original>
